<compile_context>
chip_gen: v6e
topology: v6e:2x2x1
jax: 0.10.0
libtpu: 0.0.40
codegen_flags: <defaults>
</compile_context>

<pallas_src>
import jax
import jax.numpy as jnp
from jax.experimental import pallas as pl
from jax.experimental.pallas import tpu as pltpu

_LANE = 128
_SUBLANE = 8
_SMALL_OUT_BYTES = 1 << 20        # below this: single un-gridded VMEM-resident call
_TILE_VMEM_BUDGET = 20 << 20      # conservative cap: fits v7x's 64 MiB VMEM easily


def _round_up(x, m):
    return ((x + m - 1) // m) * m


def _trunk_kernel(x_ref, w_ref, b_ref, o_ref):
    """One batch tile: o = x @ w + b with x:(tm,P), w:(P,W), b:(1,W)."""
    o_ref[...] = (
        jnp.dot(x_ref[...], w_ref[...], preferred_element_type=jnp.float32)
        + b_ref[...]
    )


def trunk_net_forward(x, weight, bias):
    """TrunkNet forward.

    Args:
      x:      (B, P) float32 input parameters.
      weight: (W, P) float32, as stored by nn.Linear (out_features, in_features).
      bias:   (W,)   float32.

    Returns:
      (B, W, 1, 1) float32, matching PyTorch's fc0(x)[:, :, None, None].
    """
    B, P = x.shape
    W = weight.shape[0]

    x = jnp.asarray(x, jnp.float32)
    # One-time, few-KB transpose so the kernel consumes the weight as (P, W):
    # dense in the 128-lane axis and in the MXU's natural orientation.
    w_t = jnp.asarray(weight, jnp.float32).T          # (P, W)
    b2 = jnp.asarray(bias, jnp.float32).reshape(1, W)

    cost = pl.CostEstimate(
        flops=2 * B * P * W,
        transcendentals=0,
        bytes_accessed=4 * (B * P + P * W + B * W + W),
    )

    out_bytes = B * W * 4
    if out_bytes <= _SMALL_OUT_BYTES:
        # Tiny problem: single un-gridded call, everything resident in VMEM.
        # TODO(synk): at the module's real shapes (B=2, P=8, W=32) even this is
        # pure launch overhead — in a full FourierDeepONet graph fc0 should be
        # left to XLA / fused into its consumer rather than run standalone.
        y = pl.pallas_call(
            _trunk_kernel,
            out_shape=jax.ShapeDtypeStruct((B, W), jnp.float32),
            in_specs=[
                pl.BlockSpec(memory_space=pltpu.MemorySpace.VMEM),
                pl.BlockSpec(memory_space=pltpu.MemorySpace.VMEM),
                pl.BlockSpec(memory_space=pltpu.MemorySpace.VMEM),
            ],
            out_specs=pl.BlockSpec(memory_space=pltpu.MemorySpace.VMEM),
            cost_estimate=cost,
        )(x, w_t, b2)
        return y[:, :, None, None]

    # ---- Tiled path: grid over B only; weight/bias resident, output (tm, W).
    # Per-row VMEM cost with double buffering: output row = W*4 bytes, x row
    # physically pads its 8-wide last dim to a full 128-lane row = 128*4 bytes.
    per_row = 2 * (W * 4) + 2 * (_LANE * 4)
    tm = _TILE_VMEM_BUDGET // per_row
    tm = max(_SUBLANE, (min(tm, 4096) // _SUBLANE) * _SUBLANE)
    if tm >= B and B >= 2 * _SUBLANE:
        # Keep >= 2 grid steps so v7x's two TensorCores both get work
        # (no-op on single-core v5e/v6e).
        tm = _round_up(pl.cdiv(B, 2), _SUBLANE)

    grid = (pl.cdiv(B, tm),)   # ragged batch tail handled as a partial block

    # Explicit VMEM budget so the same tm compiles on v7x (64 MiB physical /
    # 32 MiB default scoped) as well as v5e/v6e (128 MiB / 16-32 MiB scoped).
    vmem_needed = (
        2 * tm * W * 4            # double-buffered output tiles
        + 2 * tm * _LANE * 4      # double-buffered x tiles (lane-padded)
        + 4 * _SUBLANE * W * 4    # weight + bias (sublane-padded), with slack
    )
    vmem_limit = int(min(64 << 20, max(vmem_needed + (4 << 20), 32 << 20)))

    y = pl.pallas_call(
        _trunk_kernel,
        out_shape=jax.ShapeDtypeStruct((B, W), jnp.float32),
        grid=grid,
        in_specs=[
            pl.BlockSpec((tm, P), lambda i: (i, 0)),
            pl.BlockSpec((P, W), lambda i: (0, 0)),   # resident, never re-fetched
            pl.BlockSpec((1, W), lambda i: (0, 0)),   # resident
        ],
        out_specs=pl.BlockSpec((tm, W), lambda i: (i, 0)),
        compiler_params=pltpu.CompilerParams(
            dimension_semantics=("parallel",),
            vmem_limit_bytes=vmem_limit,
        ),
        cost_estimate=cost,
    )(x, w_t, b2)

    # [:, :, None, None] — pure metadata reshape.
    return y[:, :, None, None]


if __name__ == "__main__":
    key = jax.random.PRNGKey(0)
    kx, kw, kb, kx2 = jax.random.split(key, 4)

    # --- Small shapes consistent with the module: batch=2, num_parameter=8, width=32.
    batch, num_parameter, width = 2, 8, 32
    bound = 1.0 / (num_parameter ** 0.5)   # nn.Linear uniform init range

    weight = jax.random.uniform(
        kw, (width, num_parameter), dtype=jnp.float32, minval=-bound, maxval=bound)
    bias = jax.random.uniform(
        kb, (width,), dtype=jnp.float32, minval=-bound, maxval=bound)
    x = jax.random.normal(kx, (batch, num_parameter), dtype=jnp.float32)

    out = jax.block_until_ready(trunk_net_forward(x, weight, bias))
    ref = (x @ weight.T + bias)[:, :, None, None]
    assert out.shape == (batch, width, 1, 1), out.shape
    assert jnp.allclose(out, ref, atol=1e-5, rtol=1e-5), "mismatch vs reference (small)"

    # --- Exercise the tiled path, including a ragged (non-divisible) batch tail.
    B2, W2 = 1537, 256
    w_big = jax.random.uniform(
        kw, (W2, num_parameter), dtype=jnp.float32, minval=-bound, maxval=bound)
    b_big = jax.random.uniform(
        kb, (W2,), dtype=jnp.float32, minval=-bound, maxval=bound)
    x_big = jax.random.normal(kx2, (B2, num_parameter), dtype=jnp.float32)

    out_big = jax.block_until_ready(trunk_net_forward(x_big, w_big, b_big))
    ref_big = (x_big @ w_big.T + b_big)[:, :, None, None]
    assert out_big.shape == (B2, W2, 1, 1), out_big.shape
    assert jnp.allclose(out_big, ref_big, atol=1e-4, rtol=1e-4), "mismatch vs reference (tiled)"

    print("KERNEL_OK")
</pallas_src>

<mosaic_0001>
module attributes {stable_mosaic.version = 11 : i64} {
  func.func @_trunk_kernel(%arg0: memref<2x8xf32, #tpu.memory_space<vmem>>, %arg1: memref<8x32xf32, #tpu.memory_space<vmem>>, %arg2: memref<1x32xf32, #tpu.memory_space<vmem>>, %arg3: memref<2x32xf32, #tpu.memory_space<vmem>>) attributes {dimension_semantics = [], scalar_prefetch = 0 : i64, scratch_operands = 0 : i64, tpu.core_type = #tpu.core_type<tc>} {
    %c0 = arith.constant 0 : index
    %c0_0 = arith.constant 0 : index
    %0 = vector.load %arg0[%c0, %c0_0] : memref<2x8xf32, #tpu.memory_space<vmem>>, vector<2x8xf32>
    %c0_1 = arith.constant 0 : index
    %c0_2 = arith.constant 0 : index
    %1 = vector.load %arg1[%c0_1, %c0_2] : memref<8x32xf32, #tpu.memory_space<vmem>>, vector<8x32xf32>
    %cst = arith.constant dense<0.000000e+00> : vector<2x32xf32>
    %2 = tpu.matmul %0, %1, %cst {dimension_numbers = #tpu.dot_dimension_numbers<[1], [0], [0], [1], [0, 0, 1, 1], [], []>} : vector<2x8xf32>, vector<8x32xf32>, vector<2x32xf32> -> vector<2x32xf32>
    %c0_3 = arith.constant 0 : index
    %c0_4 = arith.constant 0 : index
    %3 = vector.load %arg2[%c0_3, %c0_4] : memref<1x32xf32, #tpu.memory_space<vmem>>, vector<1x32xf32>
    %4 = vector.broadcast %3 : vector<1x32xf32> to vector<2x32xf32>
    %5 = arith.addf %2, %4 : vector<2x32xf32>
    %c0_5 = arith.constant 0 : index
    %c0_6 = arith.constant 0 : index
    %6 = vector.load %arg3[%c0_5, %c0_6] : memref<2x32xf32, #tpu.memory_space<vmem>>, vector<2x32xf32>
    tpu.vector_store %arg3[%c0_5, %c0_6], %5 {strides = array<i32>} : memref<2x32xf32, #tpu.memory_space<vmem>>, vector<2x32xf32>,
    return
  }
}

</mosaic_0001>

<llo_original>
// kernel: tpu_custom_call.1
$region0: #{tpu_custom_call.1}
  #allocation0 [shape = 'u32[]', space=smem, size = 0x4, offset = 0x4, fixed_abs, tag = 'smem constant byte address 0x4 - core index']
  #allocation1 [shape = 'u32[144,128]{1,0:T(1,128)}', space=vmem, size = 0x12000, scoped, tag = 'internal scratch']
  %s0 = inlined_call_operand.hbm [shape: f32[2,8], index: 0, kind: input, shape index: {}]
  %s1 = inlined_call_operand.hbm [shape: f32[8,32], index: 1, kind: input, shape index: {}]
  %s2 = inlined_call_operand.vmem [shape: f32[1,32], index: 2, kind: input, shape index: {}]
  %s3 = inlined_call_operand.hbm [shape: f32[2,32], index: 3, kind: output, shape index: {}]
  %s4 = sld [smem:[#allocation0]]
  $region30: #{tpu_custom_call.1} parent=0
    _
  %s6 = ssub.s32 1, %s4
  %s7 = scalar_select 0, %s6, %s4
  $region1: #{tpu_custom_call.1} parent=0
    #allocation2 [shape = 'u8[1024]{0}', space=vmem, size = 0x400, scoped, tag = 'input window, operand 0, single buffered']
    #allocation3 [shape = 's32[1]{0}', space=sflag, size = 0x4, scoped, tag = 'scoped memory for tpu_custom_call.1']
    #allocation4 [shape = 's32[1]{0}', space=sflag, size = 0x4, scoped, tag = 'scoped memory for tpu_custom_call.1']
    #allocation5 [shape = 'u8[4096]{0}', space=vmem, size = 0x1000, scoped, tag = 'input window, operand 1, single buffered']
    #allocation6 [shape = 's32[1]{0}', space=sflag, size = 0x4, scoped, tag = 'scoped memory for tpu_custom_call.1']
    #allocation7 [shape = 'u8[1024]{0}', space=vmem, size = 0x400, scoped, tag = 'output window, operand 0, single buffered']
    %8 = vsyncpa [#allocation3], 0
    %9 = vsyncpa [#allocation6], 0
    %10 = vsyncpa [#allocation4], 0
    // Predicated region
    $region2: #{tpu_custom_call.1} parent=1 // pred_check
      _
    $region3: #{tpu_custom_call.1} parent=1 // pred_check_branch
      %12 = sbr.rel (0) target = $region5
    $region4: #{tpu_custom_call.1} parent=1 // pred_region
      %s14 = ssub.s32 32, 32
      %15 = vsyncadd [#allocation3], %s14
      %s17 = sshll.u32 [#allocation2], 4
      %s18 = int_to_ptr.vmem [resolvable:$true] %s17
      %20 = dma.hbm_to_vmem [thread:$0]  %s0, 32, %s18, [#allocation3]
    $region5: #{tpu_custom_call.1} parent=1 // pred_fallthru
      _
    // Predicated region
    $region6: #{tpu_custom_call.1} parent=1 // pred_check
      _
    $region7: #{tpu_custom_call.1} parent=1 // pred_check_branch
      %22 = sbr.rel (0) target = $region9
    $region8: #{tpu_custom_call.1} parent=1 // pred_region
      %s24 = ssub.s32 128, 128
      %25 = vsyncadd [#allocation6], %s24
      %s27 = sshll.u32 [#allocation5], 4
      %s28 = int_to_ptr.vmem [resolvable:$true] %s27
      %30 = dma.hbm_to_vmem [thread:$0]  %s1, 128, %s28, [#allocation6]
    $region9: #{tpu_custom_call.1} parent=1 // pred_fallthru
      _
    // Predicated region
    $region10: #{tpu_custom_call.1} parent=1 // pred_check
      _
    $region11: #{tpu_custom_call.1} parent=1 // pred_check_branch
      %32 = sbr.rel (0) target = $region13
    $region12: #{tpu_custom_call.1} parent=1 // pred_region
      _
    $region13: #{tpu_custom_call.1} parent=1 // pred_fallthru
      _
    // Predicated region
    $region14: #{tpu_custom_call.1} parent=1 // pred_check
      _
    $region15: #{tpu_custom_call.1} parent=1 // pred_check_branch
      %34 = sbr.rel (0) target = $region17
    $region16: #{tpu_custom_call.1} parent=1 // pred_region
      %35 = dma.done [#allocation3], 32
    $region17: #{tpu_custom_call.1} parent=1 // pred_fallthru
      _
    // Predicated region
    $region18: #{tpu_custom_call.1} parent=1 // pred_check
      _
    $region19: #{tpu_custom_call.1} parent=1 // pred_check_branch
      %37 = sbr.rel (0) target = $region21
    $region20: #{tpu_custom_call.1} parent=1 // pred_region
      %38 = dma.done [#allocation6], 128
    $region21: #{tpu_custom_call.1} parent=1 // pred_fallthru
      _
    %v39 = vld [vmem:[#allocation2] sm:$0x3]
    %v40 = vld [vmem:[#allocation5] sm:$0xff]
    %v41 = vld [vmem:[%s2] sm:$0x1]
    %v43 = vlaneseq
    %v44 = vshrl.u32 %v43, 7
    %v45 = vsub.s32 0, %v44
    %v46 = vrot.slane %v41, %v45
    %vm48 = vcmask 64512
    %v50 = vsel %vm48, %v39, 0
    %52 = vmatprep.subr.mxu0 0.0
    %53 = vmatpush1.msra.mxu0 0.0
    %54 = vmatprep.subr.mxu0 0.0
    %55 = vmatpush1.msra.mxu0 0.0
    %56 = vmatprep.subr.mxu0 0.0
    %57 = vmatpush1.msra.mxu0 0.0
    %58 = vmatprep.subr.mxu0 0.0
    %59 = vmatpush1.msra.mxu0 0.0
    %60 = vmatprep.subr.mxu0 0.0
    %61 = vmatpush1.msra.mxu0 0.0
    %62 = vmatprep.subr.mxu0 0.0
    %63 = vmatpush1.msra.mxu0 0.0
    %64 = vmatprep.subr.mxu0 0.0
    %65 = vmatpush1.msra.mxu0 0.0
    %66 = vmatprep.subr.mxu0 0.0
    %67 = vmatpush1.msra.mxu0 0.0
    %68 = vmatprep.subr.mxu0 0.0
    %69 = vmatpush1.msra.mxu0 0.0
    %70 = vmatprep.subr.mxu0 0.0
    %71 = vmatpush1.msra.mxu0 0.0
    %72 = vmatprep.subr.mxu0 0.0
    %73 = vmatpush1.msra.mxu0 0.0
    %74 = vmatprep.subr.mxu0 0.0
    %75 = vmatpush1.msra.mxu0 0.0
    %76 = vmatprep.subr.mxu0 0.0
    %77 = vmatpush1.msra.mxu0 0.0
    %78 = vmatprep.subr.mxu0 0.0
    %79 = vmatpush1.msra.mxu0 0.0
    %80 = vmatprep.subr.mxu0 0.0
    %81 = vmatpush1.msra.mxu0 0.0
    %82 = vmatprep.subr.mxu0 0.0
    %83 = vmatpush1.msra.mxu0 %v40
    %84 = vmatprep.subr.mxu0 0.0
    %85 = vmatpush2.msra.mxu0 0.0
    %86 = vmatprep.subr.mxu0 0.0
    %87 = vmatpush2.msra.mxu0 0.0
    %88 = vmatprep.subr.mxu0 0.0
    %89 = vmatpush2.msra.mxu0 0.0
    %90 = vmatprep.subr.mxu0 0.0
    %91 = vmatpush2.msra.mxu0 0.0
    %92 = vmatprep.subr.mxu0 0.0
    %93 = vmatpush2.msra.mxu0 0.0
    %94 = vmatprep.subr.mxu0 0.0
    %95 = vmatpush2.msra.mxu0 0.0
    %96 = vmatprep.subr.mxu0 0.0
    %97 = vmatpush2.msra.mxu0 0.0
    %98 = vmatprep.subr.mxu0 0.0
    %99 = vmatpush2.msra.mxu0 0.0
    %100 = vmatprep.subr.mxu0 0.0
    %101 = vmatpush2.msra.mxu0 0.0
    %102 = vmatprep.subr.mxu0 0.0
    %103 = vmatpush2.msra.mxu0 0.0
    %104 = vmatprep.subr.mxu0 0.0
    %105 = vmatpush2.msra.mxu0 0.0
    %106 = vmatprep.subr.mxu0 0.0
    %107 = vmatpush2.msra.mxu0 0.0
    %108 = vmatprep.subr.mxu0 0.0
    %109 = vmatpush2.msra.mxu0 0.0
    %110 = vmatprep.subr.mxu0 0.0
    %111 = vmatpush2.msra.mxu0 0.0
    %112 = vmatprep.subr.mxu0 0.0
    %113 = vmatpush2.msra.mxu0 0.0
    %114 = vmatprep.subr.mxu0 0.0
    %115 = vmatpush2.msra.mxu0 0.0
    %116 = vmatprep.mubr.f32.mxu0 0.0
    %117 = vmatmul.mubr.f32.gmra.mxu0 %v50
    %v118 = vpop.f32.mrf.mxu0
    %v119 = vadd.f32 %v46, %v118
    %v120 = vpop.f32.mrf.mxu0
    %121 = vdwg.mxu0
    %vm122 = vcmask 254976
    %123 = vst.msk [vmem:[#allocation7] sm:$0x3] %vm122, %v119
    // Predicated region
    $region22: #{tpu_custom_call.1} parent=1 // pred_check
      _
    $region23: #{tpu_custom_call.1} parent=1 // pred_check_branch
      %125 = sbr.rel (0) target = $region25
    $region24: #{tpu_custom_call.1} parent=1 // pred_region
      %s127 = ssub.s32 32, 32
      %128 = vsyncadd [#allocation4], %s127
      %s130 = sshll.u32 [#allocation7], 4
      %s131 = int_to_ptr.vmem [resolvable:$true] %s130
      %133 = dma.vmem_to_hbm [thread:$0]  %s131, 32, %s3, [#allocation4]
    $region25: #{tpu_custom_call.1} parent=1 // pred_fallthru
      _
    // Predicated region
    $region26: #{tpu_custom_call.1} parent=1 // pred_check
      _
    $region27: #{tpu_custom_call.1} parent=1 // pred_check_branch
      %135 = sbr.rel (0) target = $region29
    $region28: #{tpu_custom_call.1} parent=1 // pred_region
      %136 = dma.done [#allocation4], 32
    $region29: #{tpu_custom_call.1} parent=1 // pred_fallthru
      _
    %137 = vsyncpa [#allocation3], 1
    %138 = vsyncpa [#allocation6], 1
    %139 = vsyncpa [#allocation4], 1

</llo_original>
